<compile_context>
chip_gen: v5e
topology: v5e:2x2
jax: 0.10.0
libtpu: 0.0.40
codegen_flags: <defaults>
</compile_context>

<pallas_src>
import functools
import math

import jax
import jax.numpy as jnp
from jax.experimental import pallas as pl
from jax.experimental.pallas import tpu as pltpu


def _spatial_exchange_kernel(x1_ref, x2_ref, o1_ref, o2_ref, *, w, p, tc):
    # Mask built once on a (1, tc) row; jnp.where broadcasts it over (tr, tc).
    # tc is always a multiple of w, so the local column index j maps back to
    # the original W coordinate as (j % w) regardless of tile position.
    col = jax.lax.broadcasted_iota(jnp.int32, (1, tc), 1)
    col_in_w = (col & (w - 1)) if (w & (w - 1)) == 0 else (col % w)
    if (p & (p - 1)) == 0:
        mask = (col_in_w & (p - 1)) == 0
    else:
        mask = (col_in_w % p) == 0

    x1 = x1_ref[...]
    x2 = x2_ref[...]
    o1_ref[...] = jnp.where(mask, x2, x1)
    o2_ref[...] = jnp.where(mask, x1, x2)


def _largest_aligned_divisor(n, align, cap):
    """Largest d with d % align == 0, n % d == 0 and d <= cap; None if none."""
    best = None
    d = align
    cap = min(cap, n)
    while d <= cap:
        if n % d == 0:
            best = d
        d += align
    return best


# Per-array per-tile byte budget.  4 arrays x 2 pipeline buffers x 4 MiB =
# 32 MiB double-buffered footprint; vmem_limit is raised explicitly below.
_TILE_BUDGET = 4 << 20


def _pick_tiles(rows, cols, w, itemsize):
    """Choose (tr, tc) tile sizes for the (rows, cols) lane-dense view."""
    # dtype-aware sublane alignment: 8 for f32, 16 for bf16, 32 for int8/fp8.
    row_align = max(8, 32 // itemsize)

    # Preferred path: full-width tiles (contiguous DMA, no intra-tile stride).
    if row_align * cols * itemsize <= _TILE_BUDGET:
        tc = cols
    else:
        # Must split columns: tc must be a multiple of W (mask correctness)
        # and of 128 (lane-dense stores) and divide cols.
        lane_align = (w * 128) // math.gcd(w, 128)  # lcm(W, 128)
        cap_cols = max(lane_align, _TILE_BUDGET // (row_align * itemsize))
        tc = _largest_aligned_divisor(cols, lane_align, cap_cols) or cols

    # Row tile: largest aligned divisor of rows that keeps tr*tc within budget.
    row_cap = max(row_align, _TILE_BUDGET // (tc * itemsize))
    tr = _largest_aligned_divisor(rows, row_align, row_cap)
    if tr is None and row_align > 8:
        tr = _largest_aligned_divisor(rows, 8, row_cap)
    if tr is None:
        tr = rows  # full extent (allowed even when not 8-aligned)

    # v7x megacore: if the whole (non-tiny) array is a single block, split the
    # row axis so both TensorCores get work along a "parallel" grid dimension.
    if (rows // tr) * (cols // tc) == 1 and rows * cols * itemsize > (1 << 20):
        half = _largest_aligned_divisor(rows, row_align, max(row_align, tr // 2))
        if half is not None and half < tr:
            tr = half

    return tr, tc


@functools.partial(jax.jit, static_argnames=("p",), donate_argnums=(0, 1))
def spatial_exchange(x1, x2, p=2):
    assert x1.shape == x2.shape and x1.dtype == x2.dtype
    assert p >= 1
    N, C, H, W = x1.shape

    # Lane-dense 2D view: rows = N*C, cols = H*W (a multiple of W, so the
    # per-column mask pattern is preserved exactly for any W, H, p).
    R, Ccols = N * C, H * W
    x1_2d = x1.reshape(R, Ccols)
    x2_2d = x2.reshape(R, Ccols)

    itemsize = jnp.dtype(x1.dtype).itemsize
    tr, tc = _pick_tiles(R, Ccols, W, itemsize)

    grid = (R // tr, Ccols // tc)
    block = (tr, tc)
    idx = lambda i, j: (i, j)

    # Explicit VMEM budget: actual double-buffered footprint plus headroom,
    # never less than 48 MiB (fits v7x's 64 MiB physical VMEM, well within
    # the 128 MiB of v5e/v6e) — do not rely on the scoped default.
    footprint = 4 * 2 * tr * tc * itemsize
    vmem_limit = max(48 << 20, footprint + (4 << 20))

    kernel = functools.partial(_spatial_exchange_kernel, w=W, p=p, tc=tc)

    out_shape = (
        jax.ShapeDtypeStruct((R, Ccols), x1.dtype),
        jax.ShapeDtypeStruct((R, Ccols), x2.dtype),
    )
    o1_2d, o2_2d = pl.pallas_call(
        kernel,
        out_shape=out_shape,
        grid_spec=pltpu.PrefetchScalarGridSpec(
            num_scalar_prefetch=0,
            grid=grid,
            in_specs=[pl.BlockSpec(block, idx), pl.BlockSpec(block, idx)],
            out_specs=[pl.BlockSpec(block, idx), pl.BlockSpec(block, idx)],
        ),
        compiler_params=pltpu.CompilerParams(
            dimension_semantics=("parallel", "parallel"),
            vmem_limit_bytes=vmem_limit,
        ),
        # Outputs fully overwrite same-shaped inputs with identical index maps.
        # Together with donate_argnums on the jit boundary this makes the
        # aliasing real (no defensive copies of x1/x2 in HBM).
        input_output_aliases={0: 0, 1: 1},
    )(x1_2d, x2_2d)

    return o1_2d.reshape(N, C, H, W), o2_2d.reshape(N, C, H, W)


def _reference(x1, x2, p=2):
    W = x1.shape[-1]
    mask = (jnp.arange(W) % p) == 0
    o1 = jnp.where(mask, x2, x1)
    o2 = jnp.where(mask, x1, x2)
    return o1, o2


if __name__ == "__main__":
    key = jax.random.PRNGKey(0)
    k1, k2 = jax.random.split(key)
    N, C, H, W = 2, 4, 16, 16
    x1 = jax.random.normal(k1, (N, C, H, W), dtype=jnp.float32)
    x2 = jax.random.normal(k2, (N, C, H, W), dtype=jnp.float32)

    # Compute the reference first: the kernel donates/aliases its inputs, so
    # x1/x2 buffers are invalid after the call.
    ref1, ref2 = _reference(x1, x2, p=2)
    jax.block_until_ready((ref1, ref2))

    out1, out2 = spatial_exchange(x1, x2, p=2)
    jax.block_until_ready((out1, out2))

    assert out1.shape == (N, C, H, W) and out2.shape == (N, C, H, W)
    assert jnp.allclose(out1, ref1), "out_x1 mismatch"
    assert jnp.allclose(out2, ref2), "out_x2 mismatch"
    print("KERNEL_OK")
</pallas_src>

<mosaic_0001>
module attributes {stable_mosaic.version = 11 : i64} {
  func.func @_spatial_exchange_kernel(%arg0: i32, %arg1: i32, %arg2: memref<8x256xf32, #tpu.memory_space<vmem>>, %arg3: memref<8x256xf32, #tpu.memory_space<vmem>>, %arg4: memref<8x256xf32, #tpu.memory_space<vmem>>, %arg5: memref<8x256xf32, #tpu.memory_space<vmem>>) attributes {dimension_semantics = [#tpu.dimension_semantics<parallel>, #tpu.dimension_semantics<parallel>], iteration_bounds = array<i64: 1, 1>, scalar_prefetch = 0 : i64, scratch_operands = 0 : i64, tpu.core_type = #tpu.core_type<tc>, window_params = [{transform_indices = @transform_0, window_bounds = array<i64: 8, 256>}, {transform_indices = @transform_1, window_bounds = array<i64: 8, 256>}, {transform_indices = @transform_2, window_bounds = array<i64: 8, 256>}, {transform_indices = @transform_3, window_bounds = array<i64: 8, 256>}]} {
    %0 = tpu.iota {dimensions = array<i32: 1>} : vector<1x256xi32>
    %c15_i32 = arith.constant 15 : i32
    %1 = vector.broadcast %c15_i32 : i32 to vector<1x256xi32>
    %2 = arith.andi %0, %1 : vector<1x256xi32>
    %c1_i32 = arith.constant 1 : i32
    %3 = vector.broadcast %c1_i32 : i32 to vector<1x256xi32>
    %4 = arith.andi %2, %3 : vector<1x256xi32>
    %c0_i32 = arith.constant 0 : i32
    %5 = vector.broadcast %c0_i32 : i32 to vector<1x256xi32>
    %6 = arith.cmpi eq, %4, %5 : vector<1x256xi32>
    %c0 = arith.constant 0 : index
    %c0_0 = arith.constant 0 : index
    %7 = vector.load %arg2[%c0, %c0_0] : memref<8x256xf32, #tpu.memory_space<vmem>>, vector<8x256xf32>
    %c0_1 = arith.constant 0 : index
    %c0_2 = arith.constant 0 : index
    %8 = vector.load %arg3[%c0_1, %c0_2] : memref<8x256xf32, #tpu.memory_space<vmem>>, vector<8x256xf32>
    %9 = vector.shape_cast %6 : vector<1x256xi1> to vector<1x256xi1>
    %10 = vector.broadcast %9 : vector<1x256xi1> to vector<8x256xi1>
    %11 = arith.select %10, %8, %7 : vector<8x256xi1>, vector<8x256xf32>
    %c0_3 = arith.constant 0 : index
    %c0_4 = arith.constant 0 : index
    %12 = vector.load %arg4[%c0_3, %c0_4] : memref<8x256xf32, #tpu.memory_space<vmem>>, vector<8x256xf32>
    tpu.vector_store %arg4[%c0_3, %c0_4], %11 {strides = array<i32>} : memref<8x256xf32, #tpu.memory_space<vmem>>, vector<8x256xf32>,
    %13 = vector.shape_cast %6 : vector<1x256xi1> to vector<1x256xi1>
    %14 = vector.broadcast %13 : vector<1x256xi1> to vector<8x256xi1>
    %15 = arith.select %14, %7, %8 : vector<8x256xi1>, vector<8x256xf32>
    %c0_5 = arith.constant 0 : index
    %c0_6 = arith.constant 0 : index
    %16 = vector.load %arg5[%c0_5, %c0_6] : memref<8x256xf32, #tpu.memory_space<vmem>>, vector<8x256xf32>
    tpu.vector_store %arg5[%c0_5, %c0_6], %15 {strides = array<i32>} : memref<8x256xf32, #tpu.memory_space<vmem>>, vector<8x256xf32>,
    return
  }
  func.func @transform_0(%arg0: i32, %arg1: i32) -> (i32, i32) {
    %c0_i32 = arith.constant 0 : i32
    return %arg0, %arg1 : i32, i32
  }
  func.func @transform_1(%arg0: i32, %arg1: i32) -> (i32, i32) {
    %c0_i32 = arith.constant 0 : i32
    return %arg0, %arg1 : i32, i32
  }
  func.func @transform_2(%arg0: i32, %arg1: i32) -> (i32, i32) {
    %c0_i32 = arith.constant 0 : i32
    return %arg0, %arg1 : i32, i32
  }
  func.func @transform_3(%arg0: i32, %arg1: i32) -> (i32, i32) {
    %c0_i32 = arith.constant 0 : i32
    return %arg0, %arg1 : i32, i32
  }
}

</mosaic_0001>

<llo_original>
// kernel: spatial_exchange.1
$region0: #{spatial_exchange.1}
  #allocation0 [shape = 'u32[]', space=smem, size = 0x4, offset = 0x4, fixed_abs, tag = 'smem constant byte address 0x4 - core index']
  #allocation1 [shape = 'u32[72,128]{1,0:T(1,128)}', space=vmem, size = 0x9000, scoped, tag = 'internal scratch']
  %s0 = inlined_call_operand.vmem [shape: f32[8,256], index: 0, kind: input, shape index: {}, may-alias: {0,2}]
  %s1 = inlined_call_operand.vmem [shape: f32[8,256], index: 1, kind: input, shape index: {}, may-alias: {1,3}]
  %s2 = inlined_call_operand.vmem [shape: f32[8,256], index: 2, kind: output, shape index: {0}, may-alias: {0,2}]
  %s3 = inlined_call_operand.vmem [shape: f32[8,256], index: 3, kind: output, shape index: {1}, may-alias: {1,3}]
  %4 = xla_tuple %s2, %s3
  %s5 = sld [smem:[#allocation0]]
  $region26: #{spatial_exchange.1} parent=0
    _
  %s7 = ssub.s32 1, %s5
  %s8 = scalar_select 0, %s7, %s5
  // Predicated region
  $region2: #{spatial_exchange.1} parent=0 // pred_check
    _
  $region3: #{spatial_exchange.1} parent=0 // pred_check_branch
    %10 = sbr.rel (0) target = $region5
  $region4: #{spatial_exchange.1} parent=0 // pred_region
    _
  $region5: #{spatial_exchange.1} parent=0 // pred_fallthru
    _
  // Predicated region
  $region6: #{spatial_exchange.1} parent=0 // pred_check
    _
  $region7: #{spatial_exchange.1} parent=0 // pred_check_branch
    %12 = sbr.rel (0) target = $region9
  $region8: #{spatial_exchange.1} parent=0 // pred_region
    _
  $region9: #{spatial_exchange.1} parent=0 // pred_fallthru
    _
  %v13 = vlaneseq
  %v14 = vand.u32 %v13, 127
  %v15 = vadd.s32 %v14, 128
  %v16 = vand.u32 %v14, 15
  %v17 = vand.u32 %v15, 15
  %v18 = vand.u32 %v16, 1
  %v19 = vand.u32 %v17, 1
  %vm20 = vcmp.eq.s32.totalorder %v18, 0
  %vm21 = vcmp.eq.s32.totalorder %v19, 0
  %v22 = vld [vmem:[%s0] sm:$0xff]
  %v23 = vld [vmem:[%s0 + $0x8] sm:$0xff]
  %v24 = vld [vmem:[%s1] sm:$0xff]
  %v25 = vld [vmem:[%s1 + $0x8] sm:$0xff]
  %v26 = vsel %vm20, 1, 0
  %v27 = vsel %vm21, 1, 0
  %vm28 = vcmp.eq.s32.totalorder %v26, 1
  %vm29 = vcmp.eq.s32.totalorder %v27, 1
  %v30 = vsel %vm28, %v24, %v22
  %v31 = vsel %vm29, %v25, %v23
  %32 = vst [vmem:[%s2] sm:$0xff] %v30
  %33 = vst [vmem:[%s2 + $0x8] sm:$0xff] %v31
  %v34 = vsel %vm28, %v22, %v24
  %v35 = vsel %vm29, %v23, %v25
  %36 = vst [vmem:[%s3] sm:$0xff] %v34
  %37 = vst [vmem:[%s3 + $0x8] sm:$0xff] %v35
  // Predicated region
  $region10: #{spatial_exchange.1} parent=0 // pred_check
    _
  $region11: #{spatial_exchange.1} parent=0 // pred_check_branch
    %39 = sbr.rel (0) target = $region13
  $region12: #{spatial_exchange.1} parent=0 // pred_region
    _
  $region13: #{spatial_exchange.1} parent=0 // pred_fallthru
    _
  // Predicated region
  $region14: #{spatial_exchange.1} parent=0 // pred_check
    _
  $region15: #{spatial_exchange.1} parent=0 // pred_check_branch
    %41 = sbr.rel (0) target = $region17
  $region16: #{spatial_exchange.1} parent=0 // pred_region
    _
  $region17: #{spatial_exchange.1} parent=0 // pred_fallthru
    _
  // Predicated region
  $region18: #{spatial_exchange.1} parent=0 // pred_check
    _
  $region19: #{spatial_exchange.1} parent=0 // pred_check_branch
    %43 = sbr.rel (0) target = $region21
  $region20: #{spatial_exchange.1} parent=0 // pred_region
    _
  $region21: #{spatial_exchange.1} parent=0 // pred_fallthru
    _
  // Predicated region
  $region22: #{spatial_exchange.1} parent=0 // pred_check
    _
  $region23: #{spatial_exchange.1} parent=0 // pred_check_branch
    %45 = sbr.rel (0) target = $region25
  $region24: #{spatial_exchange.1} parent=0 // pred_region
    _
  $region25: #{spatial_exchange.1} parent=0 // pred_fallthru
    _

</llo_original>
